<compile_context>
chip_gen: v6e
topology: v6e:2x2x1
jax: 0.10.0
libtpu: 0.0.40
codegen_flags: <defaults>
</compile_context>

<pallas_src>
import functools

import jax
import jax.numpy as jnp
from jax.experimental import pallas as pl
from jax.experimental.pallas import tpu as pltpu


def _round_up(x, m):
    return ((x + m - 1) // m) * m


def _supcon_kernel(anchor_ref, contrast_ref, mask_ref, loss_ref, *,
                   inv_temp, scale_over_n, n_anchor):
    """One grid step: a (tm, D) block of anchor rows vs. the full (N, D)
    contrast matrix.  Accumulates the scaled per-anchor mean log-prob of
    positives into the resident (1, 1) output block."""
    i = pl.program_id(0)
    tm = anchor_ref.shape[0]
    n_contrast = contrast_ref.shape[0]

    @pl.when(i == 0)
    def _init():
        loss_ref[...] = jnp.zeros_like(loss_ref)

    # anchor @ contrast.T / temperature  (MXU; contract last dims, f32 acc)
    sim = jax.lax.dot_general(
        anchor_ref[...], contrast_ref[...],
        dimension_numbers=(((1,), (1,)), ((), ())),
        preferred_element_type=jnp.float32) * inv_temp

    # numerically stable logits (row-max subtraction)
    logits = sim - jnp.max(sim, axis=1, keepdims=True)

    # logits_mask: exclude self-contrast (global anchor row index == column)
    row_ids = i * tm + jax.lax.broadcasted_iota(jnp.int32, (tm, n_contrast), 0)
    col_ids = jax.lax.broadcasted_iota(jnp.int32, (tm, n_contrast), 1)
    logits_mask = (row_ids != col_ids).astype(jnp.float32)

    pos_mask = mask_ref[...] * logits_mask

    exp_logits = jnp.exp(logits) * logits_mask
    log_prob = logits - jnp.log(jnp.sum(exp_logits, axis=1, keepdims=True))

    num = jnp.sum(pos_mask * log_prob, axis=1, keepdims=True)   # (tm, 1)
    den = jnp.sum(pos_mask, axis=1, keepdims=True)              # (tm, 1)

    # zero out zero-padded anchor rows (when n_anchor % tm != 0)
    row_valid = (i * tm
                 + jax.lax.broadcasted_iota(jnp.int32, (tm, 1), 0)) < n_anchor
    per_row = jnp.where(row_valid, num / den, 0.0)

    # scale_over_n = -(temperature / base_temperature) / n_anchor (trace-time const)
    loss_ref[...] += scale_over_n * jnp.sum(per_row, keepdims=True)


def supcon_loss(features, labels=None, mask=None, *,
                temperature=0.07, contrast_mode='all', base_temperature=0.07,
                block_rows=None):
    """Pallas SupConLoss forward.  features: [bsz, n_views, ...] -> scalar."""
    features = jnp.asarray(features)
    if features.ndim < 3:
        raise ValueError('`features` needs to be [bsz, n_views, ...], '
                         'at least 3 dimensions are required')
    if features.ndim > 3:
        features = features.reshape(features.shape[0], features.shape[1], -1)
    bsz, n_views, dim = features.shape

    if labels is not None and mask is not None:
        raise ValueError('Cannot define both `labels` and `mask`')
    if labels is None and mask is None:
        base_mask = jnp.eye(bsz, dtype=jnp.float32)
    elif labels is not None:
        labels = jnp.asarray(labels).reshape(-1, 1)
        if labels.shape[0] != bsz:
            raise ValueError('Num of labels does not match num of features')
        base_mask = (labels == labels.T).astype(jnp.float32)
    else:
        base_mask = jnp.asarray(mask, dtype=jnp.float32)

    contrast_count = n_views
    # torch.cat(torch.unbind(features, dim=1), dim=0): view-major ordering
    contrast_feature = jnp.transpose(features, (1, 0, 2)).reshape(
        n_views * bsz, dim)
    if contrast_mode == 'one':
        anchor_feature = features[:, 0]
        anchor_count = 1
    elif contrast_mode == 'all':
        anchor_feature = contrast_feature
        anchor_count = contrast_count
    else:
        raise ValueError(f'Unknown mode: {contrast_mode}')

    n_anchor = anchor_count * bsz
    n_contrast = contrast_count * bsz
    pos_mask = jnp.tile(base_mask, (anchor_count, contrast_count))  # (n_anchor, n_contrast)

    # ---- tiling ---------------------------------------------------------
    # Anchor rows tiled in blocks of `block_rows` (multiple of 8 sublanes);
    # the full contrast matrix and a row-block of the positive mask are
    # brought into VMEM per step.  Feature dim stays whole (lane axis).
    if block_rows is None:
        block_rows = min(512, _round_up(n_anchor, 8))
    block_rows = max(8, (block_rows // 8) * 8)
    a_pad = _round_up(n_anchor, block_rows)
    if a_pad != n_anchor:
        anchor_feature = jnp.pad(anchor_feature,
                                 ((0, a_pad - n_anchor), (0, 0)))
        pos_mask = jnp.pad(pos_mask, ((0, a_pad - n_anchor), (0, 0)))

    grid = a_pad // block_rows

    kernel = functools.partial(
        _supcon_kernel,
        inv_temp=1.0 / temperature,
        scale_over_n=-(temperature / base_temperature) / n_anchor,
        n_anchor=n_anchor)

    out = pl.pallas_call(
        kernel,
        out_shape=jax.ShapeDtypeStruct((1, 1), jnp.float32),
        grid_spec=pltpu.PrefetchScalarGridSpec(
            num_scalar_prefetch=0,
            grid=(grid,),
            in_specs=[
                pl.BlockSpec((block_rows, dim), lambda i: (i, 0)),        # anchor rows
                pl.BlockSpec((n_contrast, dim), lambda i: (0, 0)),        # full contrast (resident)
                pl.BlockSpec((block_rows, n_contrast), lambda i: (i, 0)),  # positive-mask rows
            ],
            out_specs=pl.BlockSpec((1, 1), lambda i: (0, 0)),
        ),
        # the (1,1) output block is a cross-step accumulator -> sequential axis
        compiler_params=pltpu.CompilerParams(
            dimension_semantics=("arbitrary",)),
    )(anchor_feature, contrast_feature, pos_mask)

    return out[0, 0]


def supcon_loss_ref(features, labels=None, mask=None,
                    temperature=0.07, contrast_mode='all',
                    base_temperature=0.07):
    """Plain-JAX reference mirroring the PyTorch forward exactly."""
    if features.ndim > 3:
        features = features.reshape(features.shape[0], features.shape[1], -1)
    bsz, n_views, dim = features.shape
    if labels is None and mask is None:
        mask = jnp.eye(bsz, dtype=jnp.float32)
    elif labels is not None:
        labels = jnp.asarray(labels).reshape(-1, 1)
        mask = (labels == labels.T).astype(jnp.float32)
    else:
        mask = jnp.asarray(mask, dtype=jnp.float32)
    contrast_count = n_views
    contrast_feature = jnp.transpose(features, (1, 0, 2)).reshape(
        n_views * bsz, dim)
    if contrast_mode == 'one':
        anchor_feature, anchor_count = features[:, 0], 1
    else:
        anchor_feature, anchor_count = contrast_feature, contrast_count
    anchor_dot_contrast = (anchor_feature @ contrast_feature.T) / temperature
    logits = anchor_dot_contrast - jnp.max(anchor_dot_contrast, axis=1,
                                           keepdims=True)
    mask = jnp.tile(mask, (anchor_count, contrast_count))
    n_anchor = anchor_count * bsz
    logits_mask = 1.0 - jnp.eye(n_anchor, mask.shape[1], dtype=jnp.float32)
    mask = mask * logits_mask
    exp_logits = jnp.exp(logits) * logits_mask
    log_prob = logits - jnp.log(exp_logits.sum(axis=1, keepdims=True))
    mean_log_prob_pos = (mask * log_prob).sum(axis=1) / mask.sum(axis=1)
    loss = -(temperature / base_temperature) * mean_log_prob_pos
    return loss.reshape(anchor_count, bsz).mean()


if __name__ == "__main__":
    key = jax.random.PRNGKey(0)
    kf, kl = jax.random.split(key)

    # Small shapes: bsz=16, n_views=2, feature dim=128  ->  N = 32 contrast rows
    bsz, n_views, dim = 16, 2, 128
    feats = jax.random.normal(kf, (bsz, n_views, dim), dtype=jnp.float32)
    feats = feats / jnp.linalg.norm(feats, axis=-1, keepdims=True)  # SupCon expects L2-normed features
    labels = jax.random.randint(kl, (bsz,), 0, 4)

    # Supervised case (labels). block_rows=8 forces a multi-step grid at this
    # small size so the cross-block accumulation path is exercised.
    loss_sup = jax.block_until_ready(supcon_loss(feats, labels=labels,
                                                 block_rows=8))
    ref_sup = supcon_loss_ref(feats, labels=labels)

    # Unsupervised (SimCLR) case, default tiling (single block at this size).
    loss_unsup = jax.block_until_ready(supcon_loss(feats))
    ref_unsup = supcon_loss_ref(feats)

    # Tolerance covers MXU-vs-XLA f32 matmul precision differences.
    assert jnp.allclose(loss_sup, ref_sup, atol=1e-2, rtol=1e-2), \
        (loss_sup, ref_sup)
    assert jnp.allclose(loss_unsup, ref_unsup, atol=1e-2, rtol=1e-2), \
        (loss_unsup, ref_unsup)

    print("KERNEL_OK")
</pallas_src>

<mosaic_0001>
module attributes {stable_mosaic.version = 11 : i64} {
  func.func @_supcon_kernel(%arg0: i32, %arg1: memref<8x128xf32, #tpu.memory_space<vmem>>, %arg2: memref<32x128xf32, #tpu.memory_space<vmem>>, %arg3: memref<8x32xf32, #tpu.memory_space<vmem>>, %arg4: memref<1x1xf32, #tpu.memory_space<vmem>>) attributes {dimension_semantics = [#tpu.dimension_semantics<arbitrary>], iteration_bounds = array<i64: 4>, scalar_prefetch = 0 : i64, scratch_operands = 0 : i64, tpu.core_type = #tpu.core_type<tc>, window_params = [{transform_indices = @transform_0, window_bounds = array<i64: 8, 128>}, {pipeline_mode = #tpu.pipeline_mode<synchronous>, transform_indices = @transform_1, window_bounds = array<i64: 32, 128>}, {transform_indices = @transform_2, window_bounds = array<i64: 8, 32>}, {pipeline_mode = #tpu.pipeline_mode<synchronous>, transform_indices = @transform_3, window_bounds = array<i64: 1, 1>}]} {
    %c0_i32 = arith.constant 0 : i32
    %0 = arith.cmpi eq, %arg0, %c0_i32 : i32
    %1 = arith.extui %0 : i1 to i32
    %c0_i32_0 = arith.constant 0 : i32
    %2 = arith.cmpi ne, %1, %c0_i32_0 : i32
    scf.if %2 {
      %cst_19 = arith.constant 0.000000e+00 : f32
      %53 = vector.broadcast %cst_19 : f32 to vector<1x1xf32>
      %c0_20 = arith.constant 0 : index
      %c0_21 = arith.constant 0 : index
      %54 = vector.load %arg4[%c0_20, %c0_21] : memref<1x1xf32, #tpu.memory_space<vmem>>, vector<1x1xf32>
      tpu.vector_store %arg4[%c0_20, %c0_21], %53 {strides = array<i32>} : memref<1x1xf32, #tpu.memory_space<vmem>>, vector<1x1xf32>,
    } else {
    }
    %c0 = arith.constant 0 : index
    %c0_1 = arith.constant 0 : index
    %3 = vector.load %arg1[%c0, %c0_1] : memref<8x128xf32, #tpu.memory_space<vmem>>, vector<8x128xf32>
    %c0_2 = arith.constant 0 : index
    %c0_3 = arith.constant 0 : index
    %4 = vector.load %arg2[%c0_2, %c0_3] : memref<32x128xf32, #tpu.memory_space<vmem>>, vector<32x128xf32>
    %cst = arith.constant dense<0.000000e+00> : vector<8x32xf32>
    %5 = tpu.matmul %3, %4, %cst {dimension_numbers = #tpu.dot_dimension_numbers<[1], [1], [0], [0], [0, 0, 1, 0], [], []>} : vector<8x128xf32>, vector<32x128xf32>, vector<8x32xf32> -> vector<8x32xf32>
    %cst_4 = arith.constant 14.2857141 : f32
    %6 = vector.broadcast %cst_4 : f32 to vector<8x32xf32>
    %7 = arith.mulf %5, %6 : vector<8x32xf32>
    %cst_5 = arith.constant dense<0xFF800000> : vector<8xf32>
    %8 = vector.multi_reduction <maximumf>, %7, %cst_5 [1] : vector<8x32xf32> to vector<8xf32>
    %9 = vector.shape_cast %8 : vector<8xf32> to vector<8x1xf32>
    %10 = vector.broadcast %9 : vector<8x1xf32> to vector<8x32xf32>
    %11 = arith.subf %7, %10 : vector<8x32xf32>
    %c8_i32 = arith.constant 8 : i32
    %12 = arith.muli %arg0, %c8_i32 : i32
    %13 = tpu.iota {dimensions = array<i32: 0>} : vector<8x32xi32>
    %14 = vector.broadcast %12 : i32 to vector<8x32xi32>
    %15 = arith.addi %14, %13 : vector<8x32xi32>
    %16 = tpu.iota {dimensions = array<i32: 1>} : vector<8x32xi32>
    %17 = arith.cmpi ne, %15, %16 : vector<8x32xi32>
    %18 = arith.extui %17 : vector<8x32xi1> to vector<8x32xi32>
    %19 = arith.sitofp %18 : vector<8x32xi32> to vector<8x32xf32>
    %c0_6 = arith.constant 0 : index
    %c0_7 = arith.constant 0 : index
    %20 = vector.load %arg3[%c0_6, %c0_7] : memref<8x32xf32, #tpu.memory_space<vmem>>, vector<8x32xf32>
    %21 = arith.mulf %20, %19 : vector<8x32xf32>
    %22 = math.exp %11 : vector<8x32xf32>
    %23 = arith.mulf %22, %19 : vector<8x32xf32>
    %cst_8 = arith.constant dense<0.000000e+00> : vector<8xf32>
    %24 = vector.multi_reduction <add>, %23, %cst_8 [1] : vector<8x32xf32> to vector<8xf32>
    %25 = vector.shape_cast %24 : vector<8xf32> to vector<8x1xf32>
    %26 = math.log %25 : vector<8x1xf32>
    %27 = vector.broadcast %26 : vector<8x1xf32> to vector<8x32xf32>
    %28 = arith.subf %11, %27 : vector<8x32xf32>
    %29 = arith.mulf %21, %28 : vector<8x32xf32>
    %cst_9 = arith.constant dense<0.000000e+00> : vector<8xf32>
    %30 = vector.multi_reduction <add>, %29, %cst_9 [1] : vector<8x32xf32> to vector<8xf32>
    %31 = vector.shape_cast %30 : vector<8xf32> to vector<8x1xf32>
    %cst_10 = arith.constant dense<0.000000e+00> : vector<8xf32>
    %32 = vector.multi_reduction <add>, %21, %cst_10 [1] : vector<8x32xf32> to vector<8xf32>
    %33 = vector.shape_cast %32 : vector<8xf32> to vector<8x1xf32>
    %c8_i32_11 = arith.constant 8 : i32
    %34 = arith.muli %arg0, %c8_i32_11 : i32
    %35 = tpu.iota {dimensions = array<i32: 0>} : vector<8x1xi32>
    %36 = vector.broadcast %34 : i32 to vector<8x1xi32>
    %37 = arith.addi %36, %35 : vector<8x1xi32>
    %c32_i32 = arith.constant 32 : i32
    %38 = vector.broadcast %c32_i32 : i32 to vector<8x1xi32>
    %39 = arith.cmpi slt, %37, %38 : vector<8x1xi32>
    %40 = arith.divf %31, %33 : vector<8x1xf32>
    %cst_12 = arith.constant 0.000000e+00 : f32
    %41 = vector.broadcast %cst_12 : f32 to vector<8x1xf32>
    %42 = arith.select %39, %40, %41 : vector<8x1xi1>, vector<8x1xf32>
    %c0_13 = arith.constant 0 : index
    %c0_14 = arith.constant 0 : index
    %43 = vector.load %arg4[%c0_13, %c0_14] : memref<1x1xf32, #tpu.memory_space<vmem>>, vector<1x1xf32>
    %44 = vector.shape_cast %42 : vector<8x1xf32> to vector<1x8x1xf32>
    %cst_15 = arith.constant dense<0.000000e+00> : vector<1xf32>
    %45 = vector.multi_reduction <add>, %44, %cst_15 [1, 2] : vector<1x8x1xf32> to vector<1xf32>
    %46 = vector.shape_cast %45 : vector<1xf32> to vector<1x1x1xf32>
    %47 = vector.extract %46[0, 0, 0] : f32 from vector<1x1x1xf32>
    %48 = vector.broadcast %47 : f32 to vector<1x1xf32>
    %cst_16 = arith.constant -3.125000e-02 : f32
    %49 = vector.broadcast %cst_16 : f32 to vector<1x1xf32>
    %50 = arith.mulf %49, %48 : vector<1x1xf32>
    %51 = arith.addf %43, %50 : vector<1x1xf32>
    %c0_17 = arith.constant 0 : index
    %c0_18 = arith.constant 0 : index
    %52 = vector.load %arg4[%c0_17, %c0_18] : memref<1x1xf32, #tpu.memory_space<vmem>>, vector<1x1xf32>
    tpu.vector_store %arg4[%c0_17, %c0_18], %51 {strides = array<i32>} : memref<1x1xf32, #tpu.memory_space<vmem>>, vector<1x1xf32>,
    return
  }
  func.func @transform_0(%arg0: i32) -> (i32, i32) {
    %c0_i32 = arith.constant 0 : i32
    %c0_i32_0 = arith.constant 0 : i32
    return %arg0, %c0_i32 : i32, i32
  }
  func.func @transform_1(%arg0: i32) -> (i32, i32) {
    %c0_i32 = arith.constant 0 : i32
    %c0_i32_0 = arith.constant 0 : i32
    %c0_i32_1 = arith.constant 0 : i32
    return %c0_i32, %c0_i32_0 : i32, i32
  }
  func.func @transform_2(%arg0: i32) -> (i32, i32) {
    %c0_i32 = arith.constant 0 : i32
    %c0_i32_0 = arith.constant 0 : i32
    return %arg0, %c0_i32 : i32, i32
  }
  func.func @transform_3(%arg0: i32) -> (i32, i32) {
    %c0_i32 = arith.constant 0 : i32
    %c0_i32_0 = arith.constant 0 : i32
    %c0_i32_1 = arith.constant 0 : i32
    return %c0_i32, %c0_i32_0 : i32, i32
  }
}

</mosaic_0001>

<llo_original>
// kernel: tpu_custom_call.1
$region0: #{tpu_custom_call.1}
  #allocation0 [shape = 'u32[]', space=smem, size = 0x4, offset = 0x4, fixed_abs, tag = 'smem constant byte address 0x4 - core index']
  #allocation1 [shape = 'u32[144,128]{1,0:T(1,128)}', space=vmem, size = 0x12000, scoped, tag = 'internal scratch']
  %s0 = inlined_call_operand.hbm [shape: f32[32,128], index: 0, kind: input, shape index: {}]
  %s1 = inlined_call_operand.hbm [shape: f32[32,128], index: 1, kind: input, shape index: {}]
  %s2 = inlined_call_operand.hbm [shape: f32[32,32], index: 2, kind: input, shape index: {}]
  %s3 = inlined_call_operand.hbm [shape: f32[1,1], index: 3, kind: output, shape index: {}]
  %s4 = sld [smem:[#allocation0]]
  $region61: #{tpu_custom_call.1} parent=0
    _
  %s6 = ssub.s32 1, %s4
  %s7 = scalar_select 0, %s6, %s4
  $region1: #{tpu_custom_call.1} parent=0
    #allocation2 [shape = 'u8[8192]{0}', space=vmem, size = 0x2000, scoped, tag = 'input window, operand 0']
    #allocation3 [shape = 's32[2]{0}', space=sflag, size = 0x8, scoped, tag = 'scoped memory for tpu_custom_call.1']
    #allocation4 [shape = 's32[2]{0}', space=sflag, size = 0x8, scoped, tag = 'scoped memory for tpu_custom_call.1']
    #allocation5 [shape = 'u8[16384]{0}', space=vmem, size = 0x4000, scoped, tag = 'input window, operand 1, single buffered']
    #allocation6 [shape = 's32[1]{0}', space=sflag, size = 0x4, scoped, tag = 'scoped memory for tpu_custom_call.1']
    #allocation7 [shape = 'u8[8192]{0}', space=vmem, size = 0x2000, scoped, tag = 'input window, operand 2']
    #allocation8 [shape = 'u8[512]{0}', space=vmem, size = 0x400, scoped, tag = 'output window, operand 0, single buffered']
    %8 = vsyncpa [#allocation3], 0
    %s9 = scalar_lea.sflag [#allocation3], 1
    %10 = vsyncpa %s9, 0
    %11 = vsyncpa [#allocation6], 0
    %12 = vsyncpa [#allocation4], 0
    loop: start=0, step=1, limit=6
    $region2: #{tpu_custom_call.1} parent=1 // loop_pre_header
      _
    $region3: #{tpu_custom_call.1} parent=1 // loop_header
      %s14 = sphi 0, %s18
      %p15 = scmp.ge.s32.totalorder %s14, 6
      %s24 = sphi 0, %s26
      %s27 = sphi 0, %s24
      %s28 = sphi 0, %s27
      %s44 = sphi 0, %s28
      %s48 = sphi 0, %s48
      %s50 = sphi 0, %s48
      %s51 = sphi 0, %s50
      %s65 = sphi 0, %s51
      %s71 = sphi 0, %s73
      %s74 = sphi 0, %s71
      %s75 = sphi 0, %s74
      %s91 = sphi 0, %s75
      %s95 = sphi 0, %s95
      %s97 = sphi 0, %s95
      %s98 = sphi 0, %s97
      %s112 = sphi 0, %s98
    $region4: #{tpu_custom_call.1} parent=1 // loop_header_branch
      %17 = sbr.rel (%p15) target = $region8
    $region5: #{tpu_custom_call.1} parent=1 // loop_body
      %s19 = ssub.s32 %s14, 1
      %s20 = ssub.s32 %s14, 2
      %s21 = sadd.s32 %s14, 1
      %s22 = ssub.s32 %s14, %s21
      %p23 = scmp.eq.s32.totalorder %s22, 0
      %s25 = sadd.s32 %s24, 1
      %s26 = scalar_select %p23, %s24, %s25
      %p29 = pneg %p23
      %p30 = scmp.eq.s32.totalorder %s14, 3
      %p31 = por %p29, %p30
      %p32 = scmp.ne.s32.totalorder %s24, %s27
      %p33 = scmp.eq.s32.totalorder %s14, 0
      %p34 = por %p32, %p33
      %p35 = scmp.ne.s32.totalorder %s24, %s27
      %p36 = scmp.eq.s32.totalorder %s19, 3
      %p37 = por %p35, %p36
      %p38 = scmp.ne.s32.totalorder %s27, %s28
      %p39 = scmp.eq.s32.totalorder %s19, 0
      %p40 = por %p38, %p39
      %p41 = scmp.ne.s32.totalorder %s27, %s28
      %p42 = scmp.eq.s32.totalorder %s20, 3
      %p43 = por %p41, %p42
      %p45 = scmp.ne.s32.totalorder %s28, %s44
      %p46 = scmp.eq.s32.totalorder %s20, 0
      %p47 = por %p45, %p46
      %s49 = sadd.s32 %s48, 1
      %p52 = scmp.eq.s32.totalorder %s14, 3
      %p53 = scmp.ne.s32.totalorder %s48, %s50
      %p54 = scmp.eq.s32.totalorder %s14, 0
      %p55 = por %p53, %p54
      %p56 = scmp.ne.s32.totalorder %s48, %s50
      %p57 = scmp.eq.s32.totalorder %s19, 3
      %p58 = por %p56, %p57
      %p59 = scmp.ne.s32.totalorder %s50, %s51
      %p60 = scmp.eq.s32.totalorder %s19, 0
      %p61 = por %p59, %p60
      %p62 = scmp.ne.s32.totalorder %s50, %s51
      %p63 = scmp.eq.s32.totalorder %s20, 3
      %p64 = por %p62, %p63
      %p66 = scmp.ne.s32.totalorder %s51, %s65
      %p67 = scmp.eq.s32.totalorder %s20, 0
      %p68 = por %p66, %p67
      %s69 = ssub.s32 %s14, %s21
      %p70 = scmp.eq.s32.totalorder %s69, 0
      %s72 = sadd.s32 %s71, 1
      %s73 = scalar_select %p70, %s71, %s72
      %p76 = pneg %p70
      %p77 = scmp.eq.s32.totalorder %s14, 3
      %p78 = por %p76, %p77
      %p79 = scmp.ne.s32.totalorder %s71, %s74
      %p80 = scmp.eq.s32.totalorder %s14, 0
      %p81 = por %p79, %p80
      %p82 = scmp.ne.s32.totalorder %s71, %s74
      %p83 = scmp.eq.s32.totalorder %s19, 3
      %p84 = por %p82, %p83
      %p85 = scmp.ne.s32.totalorder %s74, %s75
      %p86 = scmp.eq.s32.totalorder %s19, 0
      %p87 = por %p85, %p86
      %p88 = scmp.ne.s32.totalorder %s74, %s75
      %p89 = scmp.eq.s32.totalorder %s20, 3
      %p90 = por %p88, %p89
      %p92 = scmp.ne.s32.totalorder %s75, %s91
      %p93 = scmp.eq.s32.totalorder %s20, 0
      %p94 = por %p92, %p93
      %s96 = sadd.s32 %s95, 1
      %p99 = scmp.eq.s32.totalorder %s14, 3
      %p100 = scmp.ne.s32.totalorder %s95, %s97
      %p101 = scmp.eq.s32.totalorder %s14, 0
      %p102 = por %p100, %p101
      %p103 = scmp.ne.s32.totalorder %s95, %s97
      %p104 = scmp.eq.s32.totalorder %s19, 3
      %p105 = por %p103, %p104
      %p106 = scmp.ne.s32.totalorder %s97, %s98
      %p107 = scmp.eq.s32.totalorder %s19, 0
      %p108 = por %p106, %p107
      %p109 = scmp.ne.s32.totalorder %s97, %s98
      %p110 = scmp.eq.s32.totalorder %s20, 3
      %p111 = por %p109, %p110
      %p113 = scmp.ne.s32.totalorder %s98, %s112
      %p114 = scmp.eq.s32.totalorder %s20, 0
      %p115 = por %p113, %p114
      %p116 = scmp.le.s32.totalorder 1, %s14
      %p117 = scmp.lt.s32.totalorder %s14, 5
      %p118 = pnand %p116, %p117
      %p119 = pneg %p118
      // Predicated region
      $region9: #{tpu_custom_call.1} parent=5 // pred_check
        _
      $region10: #{tpu_custom_call.1} parent=5 // pred_check_branch
        %121 = sbr.rel (%p118) target = $region12
      $region11: #{tpu_custom_call.1} parent=5 // pred_region
        %s122 = ssub.s32 %s14, 1
        // Predicated region
        $region13: #{tpu_custom_call.1} parent=11 // pred_check
          %p123 = pneg %p61
        $region14: #{tpu_custom_call.1} parent=11 // pred_check_branch
          %125 = sbr.rel (%p123) target = $region16
        $region15: #{tpu_custom_call.1} parent=11 // pred_region
          %s127 = ssub.s32 512, 512
          %128 = vsyncadd [#allocation6], %s127
          %s129 = sshll.u32 [#allocation5], 4
          %s130 = int_to_ptr.vmem [resolvable:$true] %s129
          %135 = dma.hbm_to_vmem [thread:$0]  %s1, 512, %s130, [#allocation6], 128, 128, 8
        $region16: #{tpu_custom_call.1} parent=11 // pred_fallthru
          _
      $region12: #{tpu_custom_call.1} parent=5 // pred_fallthru
        _
      %p136 = scmp.lt.s32.totalorder %s14, 4
      // Predicated region
      $region17: #{tpu_custom_call.1} parent=5 // pred_check
        %p137 = pneg %p136
      $region18: #{tpu_custom_call.1} parent=5 // pred_check_branch
        %139 = sbr.rel (%p137) target = $region20
      $region19: #{tpu_custom_call.1} parent=5 // pred_region
        // Predicated region
        $region21: #{tpu_custom_call.1} parent=19 // pred_check
          %p140 = pneg %p34
        $region22: #{tpu_custom_call.1} parent=19 // pred_check_branch
          %142 = sbr.rel (%p140) target = $region24
        $region23: #{tpu_custom_call.1} parent=19 // pred_region
          %s143 = sand.u32 %s14, 1
          %s144 = scalar_lea.sflag [#allocation3], %s143
          %s145 = sand.u32 %s24, 1
          %s146 = smul.addr %s145, 8
          %s147 = scalar_lea.vmem [#allocation2], %s146
          %s149 = ssub.s32 128, 128
          %150 = vsyncadd %s144, %s149
          %s151 = smul.addr %s14, 128
          %s152 = scalar_lea.hbm %s0, %s151
          %s154 = sshll.u32 %s147, 4
          %s155 = int_to_ptr.vmem [resolvable:$true] %s154
          %157 = dma.hbm_to_vmem [thread:$0]  %s152, 128, %s155, %s144
        $region24: #{tpu_custom_call.1} parent=19 // pred_fallthru
          _
        // Predicated region
        $region25: #{tpu_custom_call.1} parent=19 // pred_check
          %p158 = pneg %p81
        $region26: #{tpu_custom_call.1} parent=19 // pred_check_branch
          %160 = sbr.rel (%p158) target = $region28
        $region27: #{tpu_custom_call.1} parent=19 // pred_region
          %s161 = sand.u32 %s14, 1
          %s162 = scalar_lea.sflag [#allocation3], %s161
          %s163 = sand.u32 %s71, 1
          %s164 = smul.addr %s163, 8
          %s165 = scalar_lea.vmem [#allocation7], %s164
          %s167 = ssub.s32 128, 128
          %168 = vsyncadd %s162, %s167
          %s169 = smul.addr %s14, 128
          %s170 = scalar_lea.hbm %s2, %s169
          %s172 = sshll.u32 %s165, 4
          %s173 = int_to_ptr.vmem [resolvable:$true] %s172
          %175 = dma.hbm_to_vmem [thread:$0]  %s170, 128, %s173, %s162
        $region28: #{tpu_custom_call.1} parent=19 // pred_fallthru
          _
      $region20: #{tpu_custom_call.1} parent=5 // pred_fallthru
        _
      %p176 = scmp.le.s32.totalorder 1, %s14
      %p177 = scmp.lt.s32.totalorder %s14, 5
      %p178 = pnand %p176, %p177
      %p179 = pneg %p178
      // Predicated region
      $region29: #{tpu_custom_call.1} parent=5 // pred_check
        _
      $region30: #{tpu_custom_call.1} parent=5 // pred_check_branch
        %181 = sbr.rel (%p178) target = $region32
      $region31: #{tpu_custom_call.1} parent=5 // pred_region
        %s182 = ssub.s32 %s14, 1
        %s183 = sand.u32 %s19, 1
        %s184 = scalar_lea.sflag [#allocation3], %s183
        %s185 = sand.u32 %s27, 1
        %s186 = smul.addr %s185, 8
        %s187 = scalar_lea.vmem [#allocation2], %s186
        // Predicated region
        $region33: #{tpu_custom_call.1} parent=31 // pred_check
          %p188 = pneg %p40
        $region34: #{tpu_custom_call.1} parent=31 // pred_check_branch
          %190 = sbr.rel (%p188) target = $region36
        $region35: #{tpu_custom_call.1} parent=31 // pred_region
          %191 = dma.done %s184, 128
        $region36: #{tpu_custom_call.1} parent=31 // pred_fallthru
          _
        // Predicated region
        $region37: #{tpu_custom_call.1} parent=31 // pred_check
          %p192 = pneg %p61
        $region38: #{tpu_custom_call.1} parent=31 // pred_check_branch
          %194 = sbr.rel (%p192) target = $region40
        $region39: #{tpu_custom_call.1} parent=31 // pred_region
          %195 = dma.done [#allocation6], 512
        $region40: #{tpu_custom_call.1} parent=31 // pred_fallthru
          _
        %s196 = sand.u32 %s19, 1
        %s197 = scalar_lea.sflag [#allocation3], %s196
        %s198 = sand.u32 %s74, 1
        %s199 = smul.addr %s198, 8
        %s200 = scalar_lea.vmem [#allocation7], %s199
        // Predicated region
        $region41: #{tpu_custom_call.1} parent=31 // pred_check
          %p201 = pneg %p87
        $region42: #{tpu_custom_call.1} parent=31 // pred_check_branch
          %203 = sbr.rel (%p201) target = $region44
        $region43: #{tpu_custom_call.1} parent=31 // pred_region
          %204 = dma.done %s197, 128
        $region44: #{tpu_custom_call.1} parent=31 // pred_fallthru
          _
        %s205 = sand.u32 %s19, 1
        %s206 = scalar_lea.sflag [#allocation3], %s205
        %s207 = sand.u32 %s27, 1
        %s208 = smul.addr %s207, 8
        %s209 = scalar_lea.vmem [#allocation2], %s208
        %p210 = pneg %p40
        %p211 = pneg %p37
        %p212 = pneg %p61
        %p213 = pneg %p58
        %s214 = sand.u32 %s19, 1
        %s215 = scalar_lea.sflag [#allocation3], %s214
        %s216 = sand.u32 %s74, 1
        %s217 = smul.addr %s216, 8
        %s218 = scalar_lea.vmem [#allocation7], %s217
        %p219 = pneg %p87
        %p220 = pneg %p84
        %p221 = pneg %p108
        %p222 = pneg %p105
        %p223 = scmp.eq.s32.totalorder %s19, 0
        // Predicated region
        $region45: #{tpu_custom_call.1} parent=31 // pred_check
          %p224 = pneg %p223
        $region46: #{tpu_custom_call.1} parent=31 // pred_check_branch
          %226 = sbr.rel (%p224) target = $region48
        $region47: #{tpu_custom_call.1} parent=31 // pred_region
          %vm227 = vcmask 0
          %228 = vst.msk [vmem:[#allocation8] sm:$0x1] %vm227, 0.0
        $region48: #{tpu_custom_call.1} parent=31 // pred_fallthru
          _
        %v229 = vld [vmem:[%s187] sm:$0xff]
        %v230 = vld [vmem:[#allocation5] sm:$0xff]
        %v231 = vld [vmem:[#allocation5 + $0x8] sm:$0xff]
        %v232 = vld [vmem:[#allocation5 + $0x10] sm:$0xff]
        %v233 = vld [vmem:[#allocation5 + $0x18] sm:$0xff]
        %234 = vmatprep.subr.mxu0 0.0
        %235 = vmatpush1.xpose.msra.mxu0 0.0
        %236 = vmatprep.subr.mxu0 0.0
        %237 = vmatpush1.xpose.msra.mxu0 0.0
        %238 = vmatprep.subr.mxu0 0.0
        %239 = vmatpush1.xpose.msra.mxu0 0.0
        %240 = vmatprep.subr.mxu0 0.0
        %241 = vmatpush1.xpose.msra.mxu0 0.0
        %242 = vmatprep.subr.mxu0 0.0
        %243 = vmatpush1.xpose.msra.mxu0 0.0
        %244 = vmatprep.subr.mxu0 0.0
        %245 = vmatpush1.xpose.msra.mxu0 0.0
        %246 = vmatprep.subr.mxu0 0.0
        %247 = vmatpush1.xpose.msra.mxu0 0.0
        %248 = vmatprep.subr.mxu0 0.0
        %249 = vmatpush1.xpose.msra.mxu0 0.0
        %250 = vmatprep.subr.mxu0 0.0
        %251 = vmatpush1.xpose.msra.mxu0 0.0
        %252 = vmatprep.subr.mxu0 0.0
        %253 = vmatpush1.xpose.msra.mxu0 0.0
        %254 = vmatprep.subr.mxu0 0.0
        %255 = vmatpush1.xpose.msra.mxu0 0.0
        %256 = vmatprep.subr.mxu0 0.0
        %257 = vmatpush1.xpose.msra.mxu0 0.0
        %258 = vmatprep.subr.mxu0 0.0
        %259 = vmatpush1.xpose.msra.mxu0 %v233
        %260 = vmatprep.subr.mxu0 0.0
        %261 = vmatpush1.xpose.msra.mxu0 %v232
        %262 = vmatprep.subr.mxu0 0.0
        %263 = vmatpush1.xpose.msra.mxu0 %v231
        %264 = vmatprep.subr.mxu0 0.0
        %265 = vmatpush1.xpose.msra.mxu0 %v230
        %266 = vmatprep.subr.mxu0 0.0
        %267 = vmatpush2.xpose.msra.mxu0 0.0
        %268 = vmatprep.subr.mxu0 0.0
        %269 = vmatpush2.xpose.msra.mxu0 0.0
        %270 = vmatprep.subr.mxu0 0.0
        %271 = vmatpush2.xpose.msra.mxu0 0.0
        %272 = vmatprep.subr.mxu0 0.0
        %273 = vmatpush2.xpose.msra.mxu0 0.0
        %274 = vmatprep.subr.mxu0 0.0
        %275 = vmatpush2.xpose.msra.mxu0 0.0
        %276 = vmatprep.subr.mxu0 0.0
        %277 = vmatpush2.xpose.msra.mxu0 0.0
        %278 = vmatprep.subr.mxu0 0.0
        %279 = vmatpush2.xpose.msra.mxu0 0.0
        %280 = vmatprep.subr.mxu0 0.0
        %281 = vmatpush2.xpose.msra.mxu0 0.0
        %282 = vmatprep.subr.mxu0 0.0
        %283 = vmatpush2.xpose.msra.mxu0 0.0
        %284 = vmatprep.subr.mxu0 0.0
        %285 = vmatpush2.xpose.msra.mxu0 0.0
        %286 = vmatprep.subr.mxu0 0.0
        %287 = vmatpush2.xpose.msra.mxu0 0.0
        %288 = vmatprep.subr.mxu0 0.0
        %289 = vmatpush2.xpose.msra.mxu0 0.0
        %290 = vmatprep.subr.mxu0 0.0
        %291 = vmatpush2.xpose.msra.mxu0 0.0
        %292 = vmatprep.subr.mxu0 0.0
        %293 = vmatpush2.xpose.msra.mxu0 0.0
        %294 = vmatprep.subr.mxu0 0.0
        %295 = vmatpush2.xpose.msra.mxu0 0.0
        %296 = vmatprep.subr.mxu0 0.0
        %297 = vmatpush2.xpose.msra.mxu0 0.0
        %298 = vmatprep.mubr.f32.mxu0 0.0
        %299 = vmatmul.mubr.f32.gmra.mxu0 %v229
        %v300 = vpop.f32.mrf.mxu0
        %v301 = vadd.f32 0.0, %v300
        %v302 = vpop.f32.mrf.mxu0
        %303 = vdwg.mxu0
        %v304 = vmul.f32 %v301, 14.285714
        %vm305 = vcmask 261120
        %v306 = vsel %vm305, %v304, -inf
        %307 = vmax.xlane.f32.xlu0 %v306
        %v308 = vpop.xlane.xlu0 %307
        %v309 = vsub.f32 %v304, %v308
        %s310 = smul.u32 %s19, 8
        %v311 = vlaneseq
        %v312 = vshrl.u32 %v311, 7
        %v313 = vstv %s310
        %v314 = vadd.s32 %v313, %v312
        %v315 = vlaneseq
        %v316 = vand.u32 %v315, 127
        %vm317 = vcmp.ne.s32.totalorder %v314, %v316
        %v318 = vsel %vm317, 1, 0
        %v319 = vcvt.s32.f32 %v318
        %v320 = vld [vmem:[%s200] sm:$0xff]
        %v321 = vmul.f32 %v320, %v319
        %v322 = vmul.f32 %v309, 1.442695
        %v323 = vpow.pop %v322
        %v324 = vmul.f32 %v323, %v319
        %v325 = vsel %vm305, %v324, 0.0
        %326 = vadd.xlane.f32.xlu0 %v325
        %v327 = vpop.xlane.xlu0 %326
        %v328 = vlog2.pop %v327
        %v329 = vmul.f32 %v328, 0.6931472
        %v330 = vsub.f32 %v309, %v329
        %v331 = vmul.f32 %v321, %v330
        %v332 = vsel %vm305, %v331, 0.0
        %333 = vadd.xlane.f32.xlu0 %v332
        %v334 = vpop.xlane.xlu0 %333
        %v335 = vsel %vm305, %v321, 0.0
        %336 = vadd.xlane.f32.xlu0 %v335
        %v337 = vpop.xlane.xlu0 %336
        %vm338 = vcmp.lt.s32.totalorder %v314, 32
        %v339 = vrcp.pop %v337
        %v340 = vmul.f32 %v334, %v339
        %v341 = vsel %vm338, %v340, 0.0
        %v342 = vld [vmem:[#allocation8] sm:$0x1]
        %vm343 = vcmask 7168
        %v344 = vsel %vm343, %v341, 0.0
        %345 = vadd.xlane.f32.xlu0 %v344
        %v346 = vpop.xlane.xlu0 %345
        %v347 = vrot.slane %v346, 4
        %v348 = vadd.f32 %v346, %v347
        %v349 = vrot.slane %v348, 2
        %v350 = vadd.f32 %v348, %v349
        %v351 = vrot.slane %v350, 1
        %v352 = vadd.f32 %v350, %v351
        %s353 = vtos %v352
        %v354 = vstv %s353
        %v355 = vmul.f32 %v354, -0.03125
        %v356 = vadd.f32 %v342, %v355
        %vm357 = vcmask 0
        %358 = vst.msk [vmem:[#allocation8] sm:$0x1] %vm357, %v356
        // Predicated region
        $region49: #{tpu_custom_call.1} parent=31 // pred_check
          %p359 = pneg %p105
        $region50: #{tpu_custom_call.1} parent=31 // pred_check_branch
          %361 = sbr.rel (%p359) target = $region52
        $region51: #{tpu_custom_call.1} parent=31 // pred_region
          %s363 = ssub.s32 16, 16
          %364 = vsyncadd [#allocation4], %s363
          %s366 = sshll.u32 [#allocation8], 4
          %s367 = int_to_ptr.vmem [resolvable:$true] %s366
          %369 = dma.vmem_to_hbm [thread:$0]  %s367, 16, %s3, [#allocation4]
        $region52: #{tpu_custom_call.1} parent=31 // pred_fallthru
          _
        // Predicated region
        $region53: #{tpu_custom_call.1} parent=31 // pred_check
          %p370 = pneg %p105
        $region54: #{tpu_custom_call.1} parent=31 // pred_check_branch
          %372 = sbr.rel (%p370) target = $region56
        $region55: #{tpu_custom_call.1} parent=31 // pred_region
          %373 = dma.done [#allocation4], 16
        $region56: #{tpu_custom_call.1} parent=31 // pred_fallthru
          _
      $region32: #{tpu_custom_call.1} parent=5 // pred_fallthru
        _
      %p374 = scmp.le.s32.totalorder 2, %s14
      // Predicated region
      $region57: #{tpu_custom_call.1} parent=5 // pred_check
        %p375 = pneg %p374
      $region58: #{tpu_custom_call.1} parent=5 // pred_check_branch
        %377 = sbr.rel (%p375) target = $region60
      $region59: #{tpu_custom_call.1} parent=5 // pred_region
        %s378 = ssub.s32 %s14, 2
      $region60: #{tpu_custom_call.1} parent=5 // pred_fallthru
        _
    $region6: #{tpu_custom_call.1} parent=1 // loop_footer
      %s18 = sadd.s32 1, %s14
    $region7: #{tpu_custom_call.1} parent=1 // loop_footer_branch
      %13 = sbr.rel target = $region3
    $region8: #{tpu_custom_call.1} parent=1 // loop_exit
      _
    %379 = vsyncpa [#allocation3], 1
    %s380 = scalar_lea.sflag [#allocation3], 1
    %381 = vsyncpa %s380, 1
    %382 = vsyncpa [#allocation6], 1
    %383 = vsyncpa [#allocation4], 1
    %s384 = scalar_lea.sflag [#allocation4], 1
    %385 = vsyncpa %s384, 1

</llo_original>
